<compile_context>
chip_gen: v7x
topology: tpu7x:2x2x1
jax: 0.10.0
libtpu: 0.0.40
codegen_flags: <defaults>
</compile_context>

<pallas_src>
import jax
import jax.numpy as jnp
from jax.experimental import pallas as pl
from jax.experimental.pallas import tpu as pltpu


def _log_softmax_lastdim(v):
    mx = jnp.max(v, axis=-1, keepdims=True)
    shifted = v - mx
    lse = jnp.log(jnp.sum(jnp.exp(shifted), axis=-1, keepdims=True))
    return shifted - lse


def js_divergence(x, y, *, tn=None, vmem_budget_bytes=20 * 1024 * 1024):
    """JS 'divergence' exactly as the PyTorch reference defines it (2-D inputs)."""
    assert x.shape == y.shape and x.ndim == 2
    assert x.dtype == y.dtype
    n, c = x.shape

    itemsize = jnp.dtype(x.dtype).itemsize
    granule = max(8, 32 // itemsize)          # sublane packing granule (8 f32 / 16 bf16 / 32 i8)

    # Tile-height budget: 2 inputs x 2 pipeline buffers (input dtype) plus ~6 full-block
    # f32 temporaries (xb, yb, lx, ly, m, plogp/t) are live per grid step.
    bytes_per_row = (4 * itemsize + 6 * 4) * c
    tn_cap = max(granule, min(2048, vmem_budget_bytes // bytes_per_row))
    tn_cap = (tn_cap // granule) * granule
    if tn is None:
        tn = n if n <= tn_cap else tn_cap     # full-extent block is always legal
    else:
        tn = min(tn, n)
    if tn < n:
        assert tn % granule == 0, f"tn must be a multiple of {granule} for this dtype"

    grid_n = pl.cdiv(n, tn)                   # row tiles total
    n_split = 2 if grid_n >= 2 else 1         # megacore row split (v7x); serial on 1-TC chips
    bpc = pl.cdiv(grid_n, n_split)            # row tiles per core
    needs_mask = (n % tn != 0) or (grid_n % n_split != 0)
    inv_total = 1.0 / float(n * c)            # GLOBAL element count for the 'mean'

    def block_idx(p, i):
        # Clamp so the possible duplicate trailing block of an uneven core split stays in
        # range; its rows are masked out of the partial sum inside the kernel.
        return jnp.minimum(p * bpc + i, grid_n - 1)

    def kernel(x_ref, y_ref, o_ref, acc_ref):
        i = pl.program_id(1)

        @pl.when(i == 0)
        def _init():
            acc_ref[...] = jnp.zeros_like(acc_ref)

        xb = x_ref[...].astype(jnp.float32)
        yb = y_ref[...].astype(jnp.float32)

        # '+ eps' in the reference is a constant shift -> mathematical no-op for log_softmax.
        lx = _log_softmax_lastdim(xb)         # log_softmax(x + eps)
        ly = _log_softmax_lastdim(yb)         # log_softmax(y + eps)
        m = 0.5 * (lx + ly)                   # kept in log space, exactly as the reference

        # torch.xlogy(m, m): 0 where m == 0, else m*log(m) (NaN for m < 0, as the reference).
        plogp = jnp.where(m == 0.0, 0.0, m * jnp.log(m))

        # Fused summand: 0.5*(kl_xm + kl_ym) contribution = plogp - m*m.
        t = plogp - m * m
        row_sums = jnp.sum(t, axis=-1, keepdims=True)          # (tn, 1) lane-reduce

        if needs_mask:
            # Only statically-ragged / duplicate tiles pay for this branch.
            start = (pl.program_id(0) * bpc + i) * tn
            row_ids = start + jax.lax.broadcasted_iota(jnp.int32, (tn, 1), 0)
            row_sums = jnp.where(row_ids < n, row_sums, 0.0)

        acc_ref[...] += row_sums

        @pl.when(i == pl.num_programs(1) - 1)
        def _finalize():
            total = jnp.sum(acc_ref[...])                       # per-core partial sum
            o_ref[...] = jnp.full((1, 8, 128), total, dtype=jnp.float32)

    vmem_limit = int(min(48 * 1024 * 1024,
                         max(32 * 1024 * 1024, 2 * bytes_per_row * tn)))

    partials = pl.pallas_call(
        kernel,
        out_shape=jax.ShapeDtypeStruct((n_split, 8, 128), jnp.float32),
        grid=(n_split, bpc),
        in_specs=[
            pl.BlockSpec((tn, c), lambda p, i: (block_idx(p, i), 0)),
            pl.BlockSpec((tn, c), lambda p, i: (block_idx(p, i), 0)),
        ],
        # (1, 8, 128) blocks keep the output tile-aligned and give each TensorCore a
        # disjoint block; only element [p, 0, 0] is meaningful (the block is a splat).
        out_specs=pl.BlockSpec((1, 8, 128), lambda p, i: (p, 0, 0)),
        scratch_shapes=[pltpu.VMEM((tn, 1), jnp.float32)],
        compiler_params=pltpu.CompilerParams(
            dimension_semantics=("parallel", "arbitrary"),
            vmem_limit_bytes=vmem_limit,
        ),
    )(x, y)

    # out = 0.5*(mean(kl_xm) + mean(kl_ym)) = sum(plogp - m*m) / (N*C)
    return jnp.sum(partials[:, 0, 0]) * inv_total


if __name__ == "__main__":
    key = jax.random.PRNGKey(0)
    kx, ky = jax.random.split(key)
    # Small 2-D (batch, classes): nn.Softmax()/nn.LogSoftmax() -> dim=1 (last axis) for 2-D.
    N, C = 72, 128
    x = jax.random.normal(kx, (N, C), dtype=jnp.float32)
    y = jax.random.normal(ky, (N, C), dtype=jnp.float32)

    # tn=16 is used ONLY to exercise the multi-tile / two-core / ragged-row paths at demo
    # scale; the production default (tn=None) auto-sizes the tile to the VMEM budget.
    out = js_divergence(x, y, tn=16)
    out = jax.block_until_ready(out)

    # Pure-JAX reference with identical (faithful-to-PyTorch) semantics.
    lx = jax.nn.log_softmax(x + 1e-8, axis=-1)
    ly = jax.nn.log_softmax(y + 1e-8, axis=-1)
    m = 0.5 * (lx + ly)
    plogp = jnp.where(m == 0.0, 0.0, m * jnp.log(m))
    ref = jnp.mean(plogp - m * m)

    same_nan = bool(jnp.isnan(out)) == bool(jnp.isnan(ref))
    close = bool(jnp.isnan(ref)) or bool(jnp.allclose(out, ref, rtol=1e-5, atol=1e-6))
    assert same_nan and close, (out, ref)
    print("KERNEL_OK")
</pallas_src>

<mosaic_0001>
module attributes {stable_mosaic.version = 11 : i64} {
  func.func @kernel(%arg0: i32, %arg1: i32, %arg2: memref<16x128xf32, #tpu.memory_space<vmem>>, %arg3: memref<16x128xf32, #tpu.memory_space<vmem>>, %arg4: memref<1x8x128xf32, #tpu.memory_space<vmem>>, %arg5: memref<16x1xf32, #tpu.memory_space<vmem>>) attributes {dimension_semantics = [#tpu.dimension_semantics<parallel>, #tpu.dimension_semantics<arbitrary>], iteration_bounds = array<i64: 2, 3>, scalar_prefetch = 0 : i64, scratch_operands = 1 : i64, tpu.core_type = #tpu.core_type<tc>, window_params = [{transform_indices = @transform_0, window_bounds = array<i64: 16, 128>}, {transform_indices = @transform_1, window_bounds = array<i64: 16, 128>}, {transform_indices = @transform_2, window_bounds = array<i64: 1, 8, 128>}]} {
    %c0_i32 = arith.constant 0 : i32
    %0 = arith.cmpi eq, %arg1, %c0_i32 : i32
    %1 = arith.extui %0 : i1 to i32
    %c0_i32_0 = arith.constant 0 : i32
    %2 = arith.cmpi ne, %1, %c0_i32_0 : i32
    scf.if %2 {
      %cst_17 = arith.constant 0.000000e+00 : f32
      %54 = vector.broadcast %cst_17 : f32 to vector<16x1xf32>
      %c0_18 = arith.constant 0 : index
      %c0_19 = arith.constant 0 : index
      %55 = vector.load %arg5[%c0_18, %c0_19] : memref<16x1xf32, #tpu.memory_space<vmem>>, vector<16x1xf32>
      tpu.vector_store %arg5[%c0_18, %c0_19], %54 {strides = array<i32>} : memref<16x1xf32, #tpu.memory_space<vmem>>, vector<16x1xf32>,
    } else {
    }
    %c0 = arith.constant 0 : index
    %c0_1 = arith.constant 0 : index
    %3 = vector.load %arg2[%c0, %c0_1] : memref<16x128xf32, #tpu.memory_space<vmem>>, vector<16x128xf32>
    %c0_2 = arith.constant 0 : index
    %c0_3 = arith.constant 0 : index
    %4 = vector.load %arg3[%c0_2, %c0_3] : memref<16x128xf32, #tpu.memory_space<vmem>>, vector<16x128xf32>
    %cst = arith.constant dense<0xFF800000> : vector<16xf32>
    %5 = vector.multi_reduction <maximumf>, %3, %cst [1] : vector<16x128xf32> to vector<16xf32>
    %6 = vector.shape_cast %5 : vector<16xf32> to vector<16x1xf32>
    %7 = vector.broadcast %6 : vector<16x1xf32> to vector<16x128xf32>
    %8 = arith.subf %3, %7 : vector<16x128xf32>
    %9 = math.exp %8 : vector<16x128xf32>
    %cst_4 = arith.constant dense<0.000000e+00> : vector<16xf32>
    %10 = vector.multi_reduction <add>, %9, %cst_4 [1] : vector<16x128xf32> to vector<16xf32>
    %11 = vector.shape_cast %10 : vector<16xf32> to vector<16x1xf32>
    %12 = math.log %11 : vector<16x1xf32>
    %13 = vector.broadcast %12 : vector<16x1xf32> to vector<16x128xf32>
    %14 = arith.subf %8, %13 : vector<16x128xf32>
    %cst_5 = arith.constant dense<0xFF800000> : vector<16xf32>
    %15 = vector.multi_reduction <maximumf>, %4, %cst_5 [1] : vector<16x128xf32> to vector<16xf32>
    %16 = vector.shape_cast %15 : vector<16xf32> to vector<16x1xf32>
    %17 = vector.broadcast %16 : vector<16x1xf32> to vector<16x128xf32>
    %18 = arith.subf %4, %17 : vector<16x128xf32>
    %19 = math.exp %18 : vector<16x128xf32>
    %cst_6 = arith.constant dense<0.000000e+00> : vector<16xf32>
    %20 = vector.multi_reduction <add>, %19, %cst_6 [1] : vector<16x128xf32> to vector<16xf32>
    %21 = vector.shape_cast %20 : vector<16xf32> to vector<16x1xf32>
    %22 = math.log %21 : vector<16x1xf32>
    %23 = vector.broadcast %22 : vector<16x1xf32> to vector<16x128xf32>
    %24 = arith.subf %18, %23 : vector<16x128xf32>
    %25 = arith.addf %14, %24 : vector<16x128xf32>
    %cst_7 = arith.constant 5.000000e-01 : f32
    %26 = vector.broadcast %cst_7 : f32 to vector<16x128xf32>
    %27 = arith.mulf %26, %25 : vector<16x128xf32>
    %cst_8 = arith.constant 0.000000e+00 : f32
    %28 = vector.broadcast %cst_8 : f32 to vector<16x128xf32>
    %29 = arith.cmpf oeq, %27, %28 : vector<16x128xf32>
    %30 = math.log %27 : vector<16x128xf32>
    %31 = arith.mulf %27, %30 : vector<16x128xf32>
    %cst_9 = arith.constant 0.000000e+00 : f32
    %32 = vector.broadcast %cst_9 : f32 to vector<16x128xf32>
    %33 = arith.select %29, %32, %31 : vector<16x128xi1>, vector<16x128xf32>
    %34 = arith.mulf %27, %27 : vector<16x128xf32>
    %35 = arith.subf %33, %34 : vector<16x128xf32>
    %cst_10 = arith.constant dense<0.000000e+00> : vector<16xf32>
    %36 = vector.multi_reduction <add>, %35, %cst_10 [1] : vector<16x128xf32> to vector<16xf32>
    %37 = vector.shape_cast %36 : vector<16xf32> to vector<16x1xf32>
    %c3_i32 = arith.constant 3 : i32
    %38 = arith.muli %arg0, %c3_i32 : i32
    %39 = arith.addi %38, %arg1 : i32
    %c16_i32 = arith.constant 16 : i32
    %40 = arith.muli %39, %c16_i32 : i32
    %41 = tpu.iota {dimensions = array<i32: 0>} : vector<16x1xi32>
    %42 = vector.broadcast %40 : i32 to vector<16x1xi32>
    %43 = arith.addi %42, %41 : vector<16x1xi32>
    %c72_i32 = arith.constant 72 : i32
    %44 = vector.broadcast %c72_i32 : i32 to vector<16x1xi32>
    %45 = arith.cmpi slt, %43, %44 : vector<16x1xi32>
    %cst_11 = arith.constant 0.000000e+00 : f32
    %46 = vector.broadcast %cst_11 : f32 to vector<16x1xf32>
    %47 = arith.select %45, %37, %46 : vector<16x1xi1>, vector<16x1xf32>
    %c0_12 = arith.constant 0 : index
    %c0_13 = arith.constant 0 : index
    %48 = vector.load %arg5[%c0_12, %c0_13] : memref<16x1xf32, #tpu.memory_space<vmem>>, vector<16x1xf32>
    %49 = arith.addf %48, %47 : vector<16x1xf32>
    %c0_14 = arith.constant 0 : index
    %c0_15 = arith.constant 0 : index
    %50 = vector.load %arg5[%c0_14, %c0_15] : memref<16x1xf32, #tpu.memory_space<vmem>>, vector<16x1xf32>
    tpu.vector_store %arg5[%c0_14, %c0_15], %49 {strides = array<i32>} : memref<16x1xf32, #tpu.memory_space<vmem>>, vector<16x1xf32>,
    %c2_i32 = arith.constant 2 : i32
    %51 = arith.cmpi eq, %arg1, %c2_i32 : i32
    %52 = arith.extui %51 : i1 to i32
    %c0_i32_16 = arith.constant 0 : i32
    %53 = arith.cmpi ne, %52, %c0_i32_16 : i32
    scf.if %53 {
      %c0_17 = arith.constant 0 : index
      %c0_18 = arith.constant 0 : index
      %54 = vector.load %arg5[%c0_17, %c0_18] : memref<16x1xf32, #tpu.memory_space<vmem>>, vector<16x1xf32>
      %55 = vector.shape_cast %54 : vector<16x1xf32> to vector<1x16x1xf32>
      %cst_19 = arith.constant dense<0.000000e+00> : vector<1xf32>
      %56 = vector.multi_reduction <add>, %55, %cst_19 [1, 2] : vector<1x16x1xf32> to vector<1xf32>
      %57 = vector.shape_cast %56 : vector<1xf32> to vector<1x1x1xf32>
      %58 = vector.extract %57[0, 0, 0] : f32 from vector<1x1x1xf32>
      %59 = vector.broadcast %58 : f32 to vector<1x8x128xf32>
      %c0_20 = arith.constant 0 : index
      %c0_21 = arith.constant 0 : index
      %c0_22 = arith.constant 0 : index
      %60 = vector.load %arg4[%c0_20, %c0_21, %c0_22] : memref<1x8x128xf32, #tpu.memory_space<vmem>>, vector<1x8x128xf32>
      tpu.vector_store %arg4[%c0_20, %c0_21, %c0_22], %59 {strides = array<i32>} : memref<1x8x128xf32, #tpu.memory_space<vmem>>, vector<1x8x128xf32>,
    } else {
    }
    return
  }
  func.func @transform_0(%arg0: i32, %arg1: i32) -> (i32, i32) {
    %c3_i32 = arith.constant 3 : i32
    %0 = arith.muli %arg0, %c3_i32 : i32
    %1 = arith.addi %0, %arg1 : i32
    %c4_i32 = arith.constant 4 : i32
    %2 = arith.minsi %1, %c4_i32 : i32
    %c0_i32 = arith.constant 0 : i32
    %c0_i32_0 = arith.constant 0 : i32
    return %2, %c0_i32 : i32, i32
  }
  func.func @transform_1(%arg0: i32, %arg1: i32) -> (i32, i32) {
    %c3_i32 = arith.constant 3 : i32
    %0 = arith.muli %arg0, %c3_i32 : i32
    %1 = arith.addi %0, %arg1 : i32
    %c4_i32 = arith.constant 4 : i32
    %2 = arith.minsi %1, %c4_i32 : i32
    %c0_i32 = arith.constant 0 : i32
    %c0_i32_0 = arith.constant 0 : i32
    return %2, %c0_i32 : i32, i32
  }
  func.func @transform_2(%arg0: i32, %arg1: i32) -> (i32, i32, i32) {
    %c0_i32 = arith.constant 0 : i32
    %c0_i32_0 = arith.constant 0 : i32
    %c0_i32_1 = arith.constant 0 : i32
    return %arg0, %c0_i32, %c0_i32_0 : i32, i32, i32
  }
}

</mosaic_0001>

<llo_original>
// kernel: tpu_custom_call.1
$region0: #{tpu_custom_call.1}
  #allocation0 [shape = 'u32[]', space=smem, size = 0x4, offset = 0x4, fixed_abs, tag = 'smem constant byte address 0x4 - core index']
  #allocation1 [shape = 'u32[144,128]{1,0:T(1,128)}', space=vmem, size = 0x12000, scoped, tag = 'internal scratch']
  #allocation2 [shape = 'f32[16,1]{1,0:T(8,128)}', space=vmem, size = 0x2000, scoped, tag = 'scratch operand']
  %s0 = inlined_call_operand.hbm [shape: f32[72,128], index: 0, kind: input, shape index: {}]
  %s1 = inlined_call_operand.hbm [shape: f32[72,128], index: 1, kind: input, shape index: {}]
  %s2 = inlined_call_operand.hbm [shape: f32[2,8,128], index: 2, kind: output, shape index: {}]
  %s3 = sld [smem:[#allocation0]]
  $region57: #{tpu_custom_call.1} parent=0
    _
  %s5 = ssub.s32 1, %s3
  %s6 = scalar_select 0, %s5, %s3
  $region1: #{tpu_custom_call.1} parent=0
    #allocation3 [shape = 'u8[16384]{0}', space=vmem, size = 0x4000, scoped, tag = 'input window, operand 0']
    #allocation4 [shape = 's32[2]{0}', space=sflag, size = 0x8, scoped, tag = 'scoped memory for tpu_custom_call.1']
    #allocation5 [shape = 's32[2]{0}', space=sflag, size = 0x8, scoped, tag = 'scoped memory for tpu_custom_call.1']
    #allocation6 [shape = 'u8[16384]{0}', space=vmem, size = 0x4000, scoped, tag = 'input window, operand 1']
    #allocation7 [shape = 's32[2]{0}', space=sflag, size = 0x8, scoped, tag = 'scoped memory for tpu_custom_call.1']
    #allocation8 [shape = 'u8[8192]{0}', space=vmem, size = 0x2000, scoped, tag = 'output window, operand 0']
    %7 = vsyncpa [#allocation4], 0
    %s8 = scalar_lea.sflag [#allocation4], 1
    %9 = vsyncpa %s8, 0
    %10 = vsyncpa [#allocation7], 0
    %s11 = scalar_lea.sflag [#allocation7], 1
    %12 = vsyncpa %s11, 0
    %13 = vsyncpa [#allocation5], 0
    %s14 = scalar_lea.sflag [#allocation5], 1
    %15 = vsyncpa %s14, 0
    loop: start=0, step=1, limit=8
    $region2: #{tpu_custom_call.1} parent=1 // loop_pre_header
      _
    $region3: #{tpu_custom_call.1} parent=1 // loop_header
      %s17 = sphi 0, %s21
      %p18 = scmp.ge.s32.totalorder %s17, 8
      %s24 = sphi 0, %s36
      %s25 = sphi 0, %s32
      %s26 = sphi 0, %s24
      %s27 = sphi 0, %s25
      %s28 = sphi 0, %s26
      %s29 = sphi 0, %s27
      %s47 = sphi 0, %s49
      %s50 = sphi 0, %s47
      %s51 = sphi 0, %s50
      %s67 = sphi 0, %s51
      %s81 = sphi 0, %s83
      %s84 = sphi 0, %s81
      %s85 = sphi 0, %s84
      %s101 = sphi 0, %s85
      %s107 = sphi 0, %s109
      %s110 = sphi 0, %s107
      %s111 = sphi 0, %s110
      %s127 = sphi 0, %s111
    $region4: #{tpu_custom_call.1} parent=1 // loop_header_branch
      %20 = sbr.rel (%p18) target = $region8
    $region5: #{tpu_custom_call.1} parent=1 // loop_body
      %s22 = ssub.s32 %s17, 1
      %s23 = ssub.s32 %s17, 2
      %s30 = sadd.s32 1, %s25
      %p31 = scmp.ge.s32.totalorder %s30, 3
      %s32 = scalar_select %p31, 0, %s30
      %s33 = sadd.s32 1, %s24
      %s34 = scalar_select %p31, %s33, %s24
      %p35 = scmp.ge.s32.totalorder %s34, 2
      %s36 = scalar_select %p35, 0, %s34
      %s37 = smul.u32 %s24, 3
      %s38 = sadd.s32 %s37, %s25
      %p39 = scmp.lt.s32.totalorder %s38, 4
      %s40 = scalar_select %p39, %s38, 4
      %s41 = smul.u32 %s36, 3
      %s42 = sadd.s32 %s41, %s32
      %p43 = scmp.lt.s32.totalorder %s42, 4
      %s44 = scalar_select %p43, %s42, 4
      %s45 = ssub.s32 %s40, %s44
      %p46 = scmp.eq.s32.totalorder %s45, 0
      %s48 = sadd.s32 %s47, 1
      %s49 = scalar_select %p46, %s47, %s48
      %p52 = pneg %p46
      %p53 = scmp.eq.s32.totalorder %s17, 5
      %p54 = por %p52, %p53
      %p55 = scmp.ne.s32.totalorder %s47, %s50
      %p56 = scmp.eq.s32.totalorder %s17, 0
      %p57 = por %p55, %p56
      %p58 = scmp.ne.s32.totalorder %s47, %s50
      %p59 = scmp.eq.s32.totalorder %s22, 5
      %p60 = por %p58, %p59
      %p61 = scmp.ne.s32.totalorder %s50, %s51
      %p62 = scmp.eq.s32.totalorder %s22, 0
      %p63 = por %p61, %p62
      %p64 = scmp.ne.s32.totalorder %s50, %s51
      %p65 = scmp.eq.s32.totalorder %s23, 5
      %p66 = por %p64, %p65
      %p68 = scmp.ne.s32.totalorder %s51, %s67
      %p69 = scmp.eq.s32.totalorder %s23, 0
      %p70 = por %p68, %p69
      %s71 = smul.u32 %s24, 3
      %s72 = sadd.s32 %s71, %s25
      %p73 = scmp.lt.s32.totalorder %s72, 4
      %s74 = scalar_select %p73, %s72, 4
      %s75 = smul.u32 %s36, 3
      %s76 = sadd.s32 %s75, %s32
      %p77 = scmp.lt.s32.totalorder %s76, 4
      %s78 = scalar_select %p77, %s76, 4
      %s79 = ssub.s32 %s74, %s78
      %p80 = scmp.eq.s32.totalorder %s79, 0
      %s82 = sadd.s32 %s81, 1
      %s83 = scalar_select %p80, %s81, %s82
      %p86 = pneg %p80
      %p87 = scmp.eq.s32.totalorder %s17, 5
      %p88 = por %p86, %p87
      %p89 = scmp.ne.s32.totalorder %s81, %s84
      %p90 = scmp.eq.s32.totalorder %s17, 0
      %p91 = por %p89, %p90
      %p92 = scmp.ne.s32.totalorder %s81, %s84
      %p93 = scmp.eq.s32.totalorder %s22, 5
      %p94 = por %p92, %p93
      %p95 = scmp.ne.s32.totalorder %s84, %s85
      %p96 = scmp.eq.s32.totalorder %s22, 0
      %p97 = por %p95, %p96
      %p98 = scmp.ne.s32.totalorder %s84, %s85
      %p99 = scmp.eq.s32.totalorder %s23, 5
      %p100 = por %p98, %p99
      %p102 = scmp.ne.s32.totalorder %s85, %s101
      %p103 = scmp.eq.s32.totalorder %s23, 0
      %p104 = por %p102, %p103
      %s105 = ssub.s32 %s24, %s36
      %p106 = scmp.eq.s32.totalorder %s105, 0
      %s108 = sadd.s32 %s107, 1
      %s109 = scalar_select %p106, %s107, %s108
      %p112 = pneg %p106
      %p113 = scmp.eq.s32.totalorder %s17, 5
      %p114 = por %p112, %p113
      %p115 = scmp.ne.s32.totalorder %s107, %s110
      %p116 = scmp.eq.s32.totalorder %s17, 0
      %p117 = por %p115, %p116
      %p118 = scmp.ne.s32.totalorder %s107, %s110
      %p119 = scmp.eq.s32.totalorder %s22, 5
      %p120 = por %p118, %p119
      %p121 = scmp.ne.s32.totalorder %s110, %s111
      %p122 = scmp.eq.s32.totalorder %s22, 0
      %p123 = por %p121, %p122
      %p124 = scmp.ne.s32.totalorder %s110, %s111
      %p125 = scmp.eq.s32.totalorder %s23, 5
      %p126 = por %p124, %p125
      %p128 = scmp.ne.s32.totalorder %s111, %s127
      %p129 = scmp.eq.s32.totalorder %s23, 0
      %p130 = por %p128, %p129
      %p131 = scmp.le.s32.totalorder 1, %s17
      %p132 = scmp.lt.s32.totalorder %s17, 7
      %p133 = pnand %p131, %p132
      %p134 = pneg %p133
      // Predicated region
      $region9: #{tpu_custom_call.1} parent=5 // pred_check
        _
      $region10: #{tpu_custom_call.1} parent=5 // pred_check_branch
        %136 = sbr.rel (%p133) target = $region12
      $region11: #{tpu_custom_call.1} parent=5 // pred_region
        %s137 = ssub.s32 %s17, 1
      $region12: #{tpu_custom_call.1} parent=5 // pred_fallthru
        _
      %p138 = scmp.lt.s32.totalorder %s17, 6
      // Predicated region
      $region13: #{tpu_custom_call.1} parent=5 // pred_check
        %p139 = pneg %p138
      $region14: #{tpu_custom_call.1} parent=5 // pred_check_branch
        %141 = sbr.rel (%p139) target = $region16
      $region15: #{tpu_custom_call.1} parent=5 // pred_region
        // Predicated region
        $region17: #{tpu_custom_call.1} parent=15 // pred_check
          %p142 = pneg %p57
        $region18: #{tpu_custom_call.1} parent=15 // pred_check_branch
          %144 = sbr.rel (%p142) target = $region20
        $region19: #{tpu_custom_call.1} parent=15 // pred_region
          %s145 = sand.u32 %s47, 1
          %s146 = scalar_lea.sflag [#allocation4], %s145
          %s147 = sand.u32 %s47, 1
          %s148 = smul.addr %s147, 16
          %s149 = scalar_lea.vmem [#allocation3], %s148
          %s150 = smul.u32 %s24, 3
          %s151 = sadd.s32 %s150, %s25
          %p152 = scmp.lt.s32.totalorder %s151, 4
          %s153 = scalar_select %p152, %s151, 4
          %s154 = smul.u32 2, %s153
          %s155 = ssub.s32 9, %s154
          %p156 = scmp.lt.s32.totalorder %s155, 2
          %s157 = scalar_select %p156, %s155, 2
          %s158 = smul.u32 128, %s157
          %s160 = ssub.s32 256, %s158
          %161 = vsyncadd %s146, %s160
          %p162 = scmp.ne.s32.totalorder 0, %s158
          %s163 = smul.addr %s154, 128
          %s164 = scalar_lea.hbm %s0, %s163
          %s165 = smul.u32 8, %s157
          %s166 = sshll.u32 %s149, 4
          %s167 = int_to_ptr.vmem [resolvable:$true] %s166
          %s168 = sshll.u32 %s165, 4
          %172 = dma.hbm_to_vmem [thread:$0]  (%p162), %s164, %s168, %s167, %s146, 128, 128, 8
        $region20: #{tpu_custom_call.1} parent=15 // pred_fallthru
          _
        // Predicated region
        $region21: #{tpu_custom_call.1} parent=15 // pred_check
          %p173 = pneg %p91
        $region22: #{tpu_custom_call.1} parent=15 // pred_check_branch
          %175 = sbr.rel (%p173) target = $region24
        $region23: #{tpu_custom_call.1} parent=15 // pred_region
          %s176 = sand.u32 %s81, 1
          %s177 = scalar_lea.sflag [#allocation7], %s176
          %s178 = sand.u32 %s81, 1
          %s179 = smul.addr %s178, 16
          %s180 = scalar_lea.vmem [#allocation6], %s179
          %s181 = smul.u32 %s24, 3
          %s182 = sadd.s32 %s181, %s25
          %p183 = scmp.lt.s32.totalorder %s182, 4
          %s184 = scalar_select %p183, %s182, 4
          %s185 = smul.u32 2, %s184
          %s186 = ssub.s32 9, %s185
          %p187 = scmp.lt.s32.totalorder %s186, 2
          %s188 = scalar_select %p187, %s186, 2
          %s189 = smul.u32 128, %s188
          %s191 = ssub.s32 256, %s189
          %192 = vsyncadd %s177, %s191
          %p193 = scmp.ne.s32.totalorder 0, %s189
          %s194 = smul.addr %s185, 128
          %s195 = scalar_lea.hbm %s1, %s194
          %s196 = smul.u32 8, %s188
          %s197 = sshll.u32 %s180, 4
          %s198 = int_to_ptr.vmem [resolvable:$true] %s197
          %s199 = sshll.u32 %s196, 4
          %203 = dma.hbm_to_vmem [thread:$0]  (%p193), %s195, %s199, %s198, %s177, 128, 128, 8
        $region24: #{tpu_custom_call.1} parent=15 // pred_fallthru
          _
      $region16: #{tpu_custom_call.1} parent=5 // pred_fallthru
        _
      %p204 = scmp.le.s32.totalorder 1, %s17
      %p205 = scmp.lt.s32.totalorder %s17, 7
      %p206 = pnand %p204, %p205
      %p207 = pneg %p206
      // Predicated region
      $region25: #{tpu_custom_call.1} parent=5 // pred_check
        _
      $region26: #{tpu_custom_call.1} parent=5 // pred_check_branch
        %209 = sbr.rel (%p206) target = $region28
      $region27: #{tpu_custom_call.1} parent=5 // pred_region
        %s210 = ssub.s32 %s17, 1
        %s211 = sand.u32 %s50, 1
        %s212 = scalar_lea.sflag [#allocation4], %s211
        %s213 = sand.u32 %s50, 1
        %s214 = smul.addr %s213, 16
        %s215 = scalar_lea.vmem [#allocation3], %s214
        // Predicated region
        $region29: #{tpu_custom_call.1} parent=27 // pred_check
          %p216 = pneg %p63
        $region30: #{tpu_custom_call.1} parent=27 // pred_check_branch
          %218 = sbr.rel (%p216) target = $region32
        $region31: #{tpu_custom_call.1} parent=27 // pred_region
          %219 = dma.done %s212, 256
        $region32: #{tpu_custom_call.1} parent=27 // pred_fallthru
          _
        %s220 = sand.u32 %s84, 1
        %s221 = scalar_lea.sflag [#allocation7], %s220
        %s222 = sand.u32 %s84, 1
        %s223 = smul.addr %s222, 16
        %s224 = scalar_lea.vmem [#allocation6], %s223
        // Predicated region
        $region33: #{tpu_custom_call.1} parent=27 // pred_check
          %p225 = pneg %p97
        $region34: #{tpu_custom_call.1} parent=27 // pred_check_branch
          %227 = sbr.rel (%p225) target = $region36
        $region35: #{tpu_custom_call.1} parent=27 // pred_region
          %228 = dma.done %s221, 256
        $region36: #{tpu_custom_call.1} parent=27 // pred_fallthru
          _
        %s229 = sand.u32 %s50, 1
        %s230 = scalar_lea.sflag [#allocation4], %s229
        %s231 = sand.u32 %s50, 1
        %s232 = smul.addr %s231, 16
        %s233 = scalar_lea.vmem [#allocation3], %s232
        %p234 = pneg %p63
        %p235 = pneg %p60
        %s236 = sand.u32 %s84, 1
        %s237 = scalar_lea.sflag [#allocation7], %s236
        %s238 = sand.u32 %s84, 1
        %s239 = smul.addr %s238, 16
        %s240 = scalar_lea.vmem [#allocation6], %s239
        %p241 = pneg %p97
        %p242 = pneg %p94
        %p243 = pneg %p123
        %p244 = pneg %p120
        %s245 = sand.u32 %s110, 1
        %s246 = scalar_lea.sflag [#allocation5], %s245
        %s247 = sand.u32 %s110, 1
        %s248 = smul.addr %s247, 8
        %s249 = scalar_lea.vmem [#allocation8], %s248
        %s250 = smul.u32 %s26, 3
        %s251 = sadd.s32 %s250, %s27
        %p252 = scmp.lt.s32.totalorder %s251, 4
        %s253 = scalar_select %p252, %s251, 4
        %s254 = smul.u32 2, %s253
        %s255 = ssub.s32 9, %s254
        %p256 = scmp.lt.s32.totalorder %s255, 2
        %s257 = scalar_select %p256, %s255, 2
        %s258 = smul.u32 128, %s257
        %s259 = smul.u32 %s26, 3
        %s260 = sadd.s32 %s259, %s27
        %p261 = scmp.lt.s32.totalorder %s260, 4
        %s262 = scalar_select %p261, %s260, 4
        %s263 = smul.u32 2, %s262
        %s264 = ssub.s32 9, %s263
        %p265 = scmp.lt.s32.totalorder %s264, 2
        %s266 = scalar_select %p265, %s264, 2
        %s267 = smul.u32 128, %s266
        %p268 = scmp.eq.s32.totalorder %s27, 0
        // Predicated region
        $region37: #{tpu_custom_call.1} parent=27 // pred_check
          %p269 = pneg %p268
        $region38: #{tpu_custom_call.1} parent=27 // pred_check_branch
          %271 = sbr.rel (%p269) target = $region40
        $region39: #{tpu_custom_call.1} parent=27 // pred_region
          %vm272 = vcmask 7168
          %273 = vst.msk [vmem:[#allocation2] sm:$0xff] %vm272, 0.0
          %274 = vst.msk [vmem:[#allocation2 + $0x8] sm:$0xff] %vm272, 0.0
        $region40: #{tpu_custom_call.1} parent=27 // pred_fallthru
          _
        %v275 = vld [vmem:[%s215] sm:$0xff]
        %v276 = vld [vmem:[%s215 + $0x8] sm:$0xff]
        %v277 = vld [vmem:[%s224] sm:$0xff]
        %v278 = vld [vmem:[%s224 + $0x8] sm:$0xff]
        %279 = vmax.xlane.f32.xlu0 %v275
        %v280 = vpop.xlane.xlu0 %279
        %281 = vmax.xlane.f32.xlu0 %v276
        %v282 = vpop.xlane.xlu0 %281
        %v283 = vsub.f32 %v275, %v280
        %v284 = vsub.f32 %v276, %v282
        %v285 = vmul.f32 %v283, 1.442695
        %v286 = vpow.pop %v285
        %v287 = vmul.f32 %v284, 1.442695
        %v288 = vpow.pop %v287
        %289 = vadd.xlane.f32.xlu0 %v286
        %v290 = vpop.xlane.xlu0 %289
        %291 = vadd.xlane.f32.xlu0 %v288
        %v292 = vpop.xlane.xlu0 %291
        %v293 = vlog2.pop %v290
        %v294 = vmul.f32 %v293, 0.6931472
        %v295 = vlog2.pop %v292
        %v296 = vmul.f32 %v295, 0.6931472
        %v297 = vsub.f32 %v283, %v294
        %v298 = vsub.f32 %v284, %v296
        %299 = vmax.xlane.f32.xlu0 %v277
        %v300 = vpop.xlane.xlu0 %299
        %301 = vmax.xlane.f32.xlu0 %v278
        %v302 = vpop.xlane.xlu0 %301
        %v303 = vsub.f32 %v277, %v300
        %v304 = vsub.f32 %v278, %v302
        %v305 = vmul.f32 %v303, 1.442695
        %v306 = vpow.pop %v305
        %v307 = vmul.f32 %v304, 1.442695
        %v308 = vpow.pop %v307
        %309 = vadd.xlane.f32.xlu0 %v306
        %v310 = vpop.xlane.xlu0 %309
        %311 = vadd.xlane.f32.xlu0 %v308
        %v312 = vpop.xlane.xlu0 %311
        %v313 = vlog2.pop %v310
        %v314 = vmul.f32 %v313, 0.6931472
        %v315 = vlog2.pop %v312
        %v316 = vmul.f32 %v315, 0.6931472
        %v317 = vsub.f32 %v303, %v314
        %v318 = vsub.f32 %v304, %v316
        %v319 = vadd.f32 %v297, %v317
        %v320 = vadd.f32 %v298, %v318
        %v321 = vmul.f32 %v319, 0.5
        %v322 = vmul.f32 %v320, 0.5
        %vm323 = vcmp.eq.f32.partialorder %v321, 0.0
        %vm324 = vcmp.eq.f32.partialorder %v322, 0.0
        %v325 = vlog2.pop %v321
        %v326 = vmul.f32 %v325, 0.6931472
        %v327 = vlog2.pop %v322
        %v328 = vmul.f32 %v327, 0.6931472
        %v329 = vmul.f32 %v321, %v326
        %v330 = vmul.f32 %v322, %v328
        %v331 = vsel %vm323, 0.0, %v329
        %v332 = vsel %vm324, 0.0, %v330
        %v333 = vmul.f32 %v321, %v321
        %v334 = vmul.f32 %v322, %v322
        %v335 = vsub.f32 %v331, %v333
        %v336 = vsub.f32 %v332, %v334
        %337 = vadd.xlane.f32.xlu0 %v335
        %v338 = vpop.xlane.xlu0 %337
        %339 = vadd.xlane.f32.xlu0 %v336
        %v340 = vpop.xlane.xlu0 %339
        %s341 = smul.u32 %s26, 3
        %s342 = sadd.s32 %s341, %s27
        %s343 = smul.u32 %s342, 16
        %v344 = vlaneseq
        %v345 = vshrl.u32 %v344, 7
        %v346 = vadd.s32 %v345, 8
        %v347 = vstv %s343
        %v348 = vadd.s32 %v347, %v345
        %v349 = vadd.s32 %v347, %v346
        %vm350 = vcmp.lt.s32.totalorder %v348, 72
        %vm351 = vcmp.lt.s32.totalorder %v349, 72
        %v352 = vsel %vm350, %v338, 0.0
        %v353 = vsel %vm351, %v340, 0.0
        %v354 = vld [vmem:[#allocation2] sm:$0xff]
        %v355 = vld [vmem:[#allocation2 + $0x8] sm:$0xff]
        %v356 = vadd.f32 %v354, %v352
        %v357 = vadd.f32 %v355, %v353
        %vm358 = vcmask 7168
        %359 = vst.msk [vmem:[#allocation2] sm:$0xff] %vm358, %v356
        %360 = vst.msk [vmem:[#allocation2 + $0x8] sm:$0xff] %vm358, %v357
        %p361 = scmp.eq.s32.totalorder %s27, 2
        // Predicated region
        $region41: #{tpu_custom_call.1} parent=27 // pred_check
          %p362 = pneg %p361
        $region42: #{tpu_custom_call.1} parent=27 // pred_check_branch
          %364 = sbr.rel (%p362) target = $region44
        $region43: #{tpu_custom_call.1} parent=27 // pred_region
          %v365 = vld [vmem:[#allocation2] sm:$0xff]
          %v366 = vld [vmem:[#allocation2 + $0x8] sm:$0xff]
          %v367 = vsel %vm358, %v365, 0.0
          %v368 = vsel %vm358, %v366, 0.0
          %v369 = vadd.f32 %v367, %v368
          %370 = vadd.xlane.f32.xlu0 %v369
          %v371 = vpop.xlane.xlu0 %370
          %v372 = vrot.slane %v371, 4
          %v373 = vadd.f32 %v371, %v372
          %v374 = vrot.slane %v373, 2
          %v375 = vadd.f32 %v373, %v374
          %v376 = vrot.slane %v375, 1
          %v377 = vadd.f32 %v375, %v376
          %s378 = vtos %v377
          %v379 = vstv %s378
          %380 = vst [vmem:[%s249] sm:$0xff] %v379
        $region44: #{tpu_custom_call.1} parent=27 // pred_fallthru
          _
        %s381 = sand.u32 %s110, 1
        %s382 = scalar_lea.sflag [#allocation5], %s381
        %s383 = sand.u32 %s110, 1
        %s384 = smul.addr %s383, 8
        %s385 = scalar_lea.vmem [#allocation8], %s384
        // Predicated region
        $region45: #{tpu_custom_call.1} parent=27 // pred_check
          %p386 = pneg %p120
        $region46: #{tpu_custom_call.1} parent=27 // pred_check_branch
          %388 = sbr.rel (%p386) target = $region48
        $region47: #{tpu_custom_call.1} parent=27 // pred_region
          %s390 = ssub.s32 128, 128
          %391 = vsyncadd %s382, %s390
          %s392 = smul.addr %s26, 128
          %s393 = scalar_lea.hbm %s2, %s392
          %s395 = sshll.u32 %s385, 4
          %s396 = int_to_ptr.vmem [resolvable:$true] %s395
          %398 = dma.vmem_to_hbm [thread:$0]  %s396, 128, %s393, %s382
        $region48: #{tpu_custom_call.1} parent=27 // pred_fallthru
          _
      $region28: #{tpu_custom_call.1} parent=5 // pred_fallthru
        _
      %p399 = scmp.le.s32.totalorder 2, %s17
      // Predicated region
      $region49: #{tpu_custom_call.1} parent=5 // pred_check
        %p400 = pneg %p399
      $region50: #{tpu_custom_call.1} parent=5 // pred_check_branch
        %402 = sbr.rel (%p400) target = $region52
      $region51: #{tpu_custom_call.1} parent=5 // pred_region
        %s403 = ssub.s32 %s17, 2
        // Predicated region
        $region53: #{tpu_custom_call.1} parent=51 // pred_check
          %p404 = pneg %p126
        $region54: #{tpu_custom_call.1} parent=51 // pred_check_branch
          %406 = sbr.rel (%p404) target = $region56
        $region55: #{tpu_custom_call.1} parent=51 // pred_region
          %s407 = sand.u32 %s111, 1
          %s408 = scalar_lea.sflag [#allocation5], %s407
          %s409 = sand.u32 %s111, 1
          %s410 = smul.addr %s409, 8
          %s411 = scalar_lea.vmem [#allocation8], %s410
          %412 = dma.done %s408, 128
        $region56: #{tpu_custom_call.1} parent=51 // pred_fallthru
          _
      $region52: #{tpu_custom_call.1} parent=5 // pred_fallthru
        _
    $region6: #{tpu_custom_call.1} parent=1 // loop_footer
      %s21 = sadd.s32 1, %s17
    $region7: #{tpu_custom_call.1} parent=1 // loop_footer_branch
      %16 = sbr.rel target = $region3
    $region8: #{tpu_custom_call.1} parent=1 // loop_exit
      _
    %413 = vsyncpa [#allocation4], 1
    %s414 = scalar_lea.sflag [#allocation4], 1
    %415 = vsyncpa %s414, 1
    %416 = vsyncpa [#allocation7], 1
    %s417 = scalar_lea.sflag [#allocation7], 1
    %418 = vsyncpa %s417, 1
    %419 = vsyncpa [#allocation5], 1
    %s420 = scalar_lea.sflag [#allocation5], 1
    %421 = vsyncpa %s420, 1

</llo_original>
